<compile_context>
chip_gen: v7x
topology: tpu7x:2x2x1
jax: 0.10.0
libtpu: 0.0.40
codegen_flags: <defaults>
</compile_context>

<pallas_src>
import functools
import math

import jax
import jax.numpy as jnp
from jax.experimental import pallas as pl
from jax.experimental.pallas import tpu as pltpu


def _resident_kernel(idx_ref, emb_ref, out_ref):
    # idx_ref : (TN, 1)  int32   node ids for this row tile
    # emb_ref : (NK, D)  float32 whole padded table, VMEM-resident (const idx map)
    # out_ref : (TN, D)  float32
    idx = idx_ref[...]                                    # (TN, 1)
    tn = idx.shape[0]
    nk = emb_ref.shape[0]
    node_ids = jax.lax.broadcasted_iota(jnp.int32, (tn, nk), 1)
    onehot = (idx == node_ids).astype(jnp.float32)        # (TN, NK)
    out_ref[...] = jnp.dot(onehot, emb_ref[...],
                           preferred_element_type=jnp.float32)


def _streaming_kernel(idx_ref, emb_ref, out_ref):
    # idx_ref : (TN, 1)  int32   node ids (same block across k)
    # emb_ref : (TK, D)  float32 k-th slab of the padded table
    # out_ref : (TN, D)  float32 resident across the K axis (accumulator)
    k = pl.program_id(1)
    idx = idx_ref[...]                                    # (TN, 1)
    tn = idx.shape[0]
    tk = emb_ref.shape[0]
    node_ids = k * tk + jax.lax.broadcasted_iota(jnp.int32, (tn, tk), 1)
    onehot = (idx == node_ids).astype(jnp.float32)        # (TN, TK)
    contrib = jnp.dot(onehot, emb_ref[...],
                      preferred_element_type=jnp.float32)

    @pl.when(k == 0)
    def _():
        out_ref[...] = contrib                            # no zero-init / RMW

    @pl.when(k > 0)
    def _():
        out_ref[...] += contrib


def prepare_embedding_table(emb_table, node_mask=None):
    """One-time preprocessing (keep the result around; do NOT redo per step):
    cast to f32, fold the node mask into the rows (masked rows -> 0), and pad
    the row count to a multiple of 128 with zero rows."""
    num_nodes, _ = emb_table.shape
    table = emb_table.astype(jnp.float32)
    if node_mask is not None:
        keep = (node_mask.astype(jnp.float32) > 0.0).astype(jnp.float32)
        table = table * keep[:, None]
    kpad = (-num_nodes) % 128
    if kpad:
        table = jnp.pad(table, ((0, kpad), (0, 0)))
    return table


@functools.partial(jax.jit,
                   static_argnames=("tile_n", "tile_k", "resident_vmem_bytes"))
def node_embedding_forward(node_idx, prepared_table, *,
                           tile_n=None, tile_k=512,
                           resident_vmem_bytes=24 << 20):
    """node_idx: (N,) int; prepared_table: output of prepare_embedding_table().
    Returns (N, D) f32; rows whose id is out of range or masked are zeros.
    NOTE: node indices are assumed non-negative (as with torch.nn.Embedding)."""
    n = node_idx.shape[0]
    nk, d = prepared_table.shape

    # ---- choose execution path (static shape decision) --------------------
    tile_n_res = 256
    resident_cost = 4 * (2 * nk * d              # table (double-buffer worst case)
                         + 2 * tile_n_res * d    # output tiles
                         + 3 * tile_n_res * nk)  # iota / bool / one-hot temps
    resident = resident_cost <= resident_vmem_bytes

    if tile_n is None:
        # Streaming re-reads the table once per row tile -> go big on tile_n.
        tile_n = 256 if resident else 512
    # Keep >= 2 blocks on the parallel row axis when enough rows exist so both
    # v7x TensorCores get work; never pad tiny N beyond a single block.
    n_blk = (n + 127) // 128
    if n_blk >= 2:
        tile_n = min(tile_n, 128 * ((n_blk + 1) // 2))
    tile_n = max(128, min(tile_n, 128 * n_blk))

    npad = (-n) % tile_n
    nn = n + npad
    # Padded rows get an id that matches no table row -> exact zero rows.
    idx2d = jnp.pad(node_idx.astype(jnp.int32), (0, npad),
                    constant_values=nk).reshape(nn, 1)

    if resident:
        grid = (nn // tile_n,)
        in_specs = [
            pl.BlockSpec((tile_n, 1), lambda i: (i, 0)),   # node ids
            pl.BlockSpec((nk, d), lambda i: (0, 0)),       # resident table
        ]
        out_specs = pl.BlockSpec((tile_n, d), lambda i: (i, 0))
        dim_sem = ("parallel",)
        kernel = _resident_kernel
        vmem_need = 4 * (2 * nk * d + 2 * tile_n * d + 2 * tile_n
                         + 3 * tile_n * nk)
    else:
        # tile_k must divide nk (nk is a multiple of 128 from prepare_*).
        tile_k = 128 * math.gcd(nk // 128, max(tile_k // 128, 1))
        grid = (nn // tile_n, nk // tile_k)
        in_specs = [
            pl.BlockSpec((tile_n, 1), lambda i, k: (i, 0)),  # node ids
            pl.BlockSpec((tile_k, d), lambda i, k: (k, 0)),  # table slab
        ]
        out_specs = pl.BlockSpec((tile_n, d), lambda i, k: (i, 0))
        dim_sem = ("parallel", "arbitrary")
        kernel = _streaming_kernel
        vmem_need = 4 * (2 * tile_k * d + 2 * tile_n * d + 2 * tile_n
                         + 3 * tile_n * tile_k)

    # Explicit scoped-VMEM budget: floor 32 MiB (v5e default is only 16 MiB),
    # cap 48 MiB so it stays valid on v7x (64 MiB physical per core).
    vmem_limit = int(min(max(2 * vmem_need, 32 << 20), 48 << 20))

    out_full = pl.pallas_call(
        kernel,
        out_shape=jax.ShapeDtypeStruct((nn, d), jnp.float32),
        grid_spec=pltpu.PrefetchScalarGridSpec(
            num_scalar_prefetch=0,
            grid=grid,
            in_specs=in_specs,
            out_specs=out_specs,
        ),
        compiler_params=pltpu.CompilerParams(
            dimension_semantics=dim_sem,
            vmem_limit_bytes=vmem_limit,
        ),
    )(idx2d, prepared_table)

    return out_full[:n]


def _reference(node_idx, emb_table, node_mask):
    num_nodes, _ = emb_table.shape
    valid = node_idx < num_nodes
    safe_idx = jnp.where(valid, node_idx, 0)
    keep = valid
    if node_mask is not None:
        keep = keep & (node_mask[safe_idx] > 0)
    gathered = emb_table[safe_idx]
    return jnp.where(keep[:, None], gathered, 0.0)


if __name__ == "__main__":
    num_nodes = 300     # not a multiple of 128 -> exercises table padding
    repr_dim = 128
    n = 200             # not a multiple of tile_n -> exercises row padding

    key = jax.random.PRNGKey(0)
    k_emb, k_idx = jax.random.split(key)

    # Deterministic synthetic parameters (nn.Embedding(num_nodes, repr_dim)).
    emb_table = jax.random.normal(k_emb, (num_nodes, repr_dim), dtype=jnp.float32)
    # Optional node mask (drop every 5th node).
    node_mask = (jnp.arange(num_nodes) % 5 != 0).astype(jnp.float32)
    # node_idx mixes in-range and out-of-range ids (out-of-range rows -> zeros).
    node_idx = jax.random.randint(k_idx, (n,), 0, num_nodes + 64, dtype=jnp.int32)

    # --- masked, resident-table fast path (padded table is ~192 KiB) -------
    table_masked = prepare_embedding_table(emb_table, node_mask)
    out = jax.block_until_ready(node_embedding_forward(node_idx, table_masked))
    ref = _reference(node_idx, emb_table, node_mask)
    assert out.shape == (n, repr_dim) and out.dtype == jnp.float32
    assert jnp.allclose(out, ref, atol=1e-5, rtol=1e-5)

    # --- streaming path (forced by zeroing the resident budget) ------------
    out_stream = jax.block_until_ready(
        node_embedding_forward(node_idx, table_masked,
                               tile_k=128, resident_vmem_bytes=0))
    assert jnp.allclose(out_stream, ref, atol=1e-5, rtol=1e-5)

    # --- mask=None path -----------------------------------------------------
    table_plain = prepare_embedding_table(emb_table, None)
    out_nomask = jax.block_until_ready(
        node_embedding_forward(node_idx, table_plain))
    ref_nomask = _reference(node_idx, emb_table, None)
    assert jnp.allclose(out_nomask, ref_nomask, atol=1e-5, rtol=1e-5)

    print("KERNEL_OK")
</pallas_src>

<mosaic_0001>
module attributes {stable_mosaic.version = 11 : i64} {
  func.func @_resident_kernel(%arg0: i32, %arg1: memref<128x1xi32, #tpu.memory_space<vmem>>, %arg2: memref<384x128xf32, #tpu.memory_space<vmem>>, %arg3: memref<128x128xf32, #tpu.memory_space<vmem>>) attributes {dimension_semantics = [#tpu.dimension_semantics<parallel>], iteration_bounds = array<i64: 2>, scalar_prefetch = 0 : i64, scratch_operands = 0 : i64, tpu.core_type = #tpu.core_type<tc>, window_params = [{transform_indices = @transform_0, window_bounds = array<i64: 128, 1>}, {pipeline_mode = #tpu.pipeline_mode<synchronous>, transform_indices = @transform_1, window_bounds = array<i64: 384, 128>}, {transform_indices = @transform_2, window_bounds = array<i64: 128, 128>}]} {
    %c0 = arith.constant 0 : index
    %c0_0 = arith.constant 0 : index
    %0 = vector.load %arg1[%c0, %c0_0] : memref<128x1xi32, #tpu.memory_space<vmem>>, vector<128x1xi32>
    %1 = tpu.iota {dimensions = array<i32: 1>} : vector<128x384xi32>
    %2 = vector.broadcast %0 : vector<128x1xi32> to vector<128x384xi32>
    %3 = arith.cmpi eq, %2, %1 : vector<128x384xi32>
    %4 = arith.extui %3 : vector<128x384xi1> to vector<128x384xi32>
    %5 = arith.sitofp %4 : vector<128x384xi32> to vector<128x384xf32>
    %c0_1 = arith.constant 0 : index
    %c0_2 = arith.constant 0 : index
    %6 = vector.load %arg2[%c0_1, %c0_2] : memref<384x128xf32, #tpu.memory_space<vmem>>, vector<384x128xf32>
    %cst = arith.constant dense<0.000000e+00> : vector<128x128xf32>
    %7 = tpu.matmul %5, %6, %cst {dimension_numbers = #tpu.dot_dimension_numbers<[1], [0], [0], [1], [0, 0, 1, 1], [], []>} : vector<128x384xf32>, vector<384x128xf32>, vector<128x128xf32> -> vector<128x128xf32>
    %c0_3 = arith.constant 0 : index
    %c0_4 = arith.constant 0 : index
    %8 = vector.load %arg3[%c0_3, %c0_4] : memref<128x128xf32, #tpu.memory_space<vmem>>, vector<128x128xf32>
    tpu.vector_store %arg3[%c0_3, %c0_4], %7 {strides = array<i32>} : memref<128x128xf32, #tpu.memory_space<vmem>>, vector<128x128xf32>,
    return
  }
  func.func @transform_0(%arg0: i32) -> (i32, i32) {
    %c0_i32 = arith.constant 0 : i32
    %c0_i32_0 = arith.constant 0 : i32
    return %arg0, %c0_i32 : i32, i32
  }
  func.func @transform_1(%arg0: i32) -> (i32, i32) {
    %c0_i32 = arith.constant 0 : i32
    %c0_i32_0 = arith.constant 0 : i32
    %c0_i32_1 = arith.constant 0 : i32
    return %c0_i32, %c0_i32_0 : i32, i32
  }
  func.func @transform_2(%arg0: i32) -> (i32, i32) {
    %c0_i32 = arith.constant 0 : i32
    %c0_i32_0 = arith.constant 0 : i32
    return %arg0, %c0_i32 : i32, i32
  }
}

</mosaic_0001>

<llo_original>
// kernel: node_embedding_forward.1
$region0: #{node_embedding_forward.1}
  #allocation0 [shape = 'u32[]', space=smem, size = 0x4, offset = 0x4, fixed_abs, tag = 'smem constant byte address 0x4 - core index']
  #allocation1 [shape = 'u32[144,128]{1,0:T(1,128)}', space=vmem, size = 0x12000, scoped, tag = 'internal scratch']
  %s0 = inlined_call_operand.vmem [shape: s32[256,1], index: 0, kind: input, shape index: {}]
  %s1 = inlined_call_operand.hbm [shape: f32[384,128], index: 1, kind: input, shape index: {}]
  %s2 = inlined_call_operand.vmem [shape: f32[256,128], index: 2, kind: output, shape index: {}]
  %s3 = sld [smem:[#allocation0]]
  $region45: #{node_embedding_forward.1} parent=0
    _
  %s5 = ssub.s32 1, %s3
  %s6 = scalar_select 0, %s5, %s3
  $region1: #{node_embedding_forward.1} parent=0
    #allocation2 [shape = 'u8[196608]{0}', space=vmem, size = 0x30000, scoped, tag = 'input window, operand 1, single buffered']
    #allocation3 [shape = 's32[2]{0}', space=sflag, size = 0x8, scoped, tag = 'scoped memory for node_embedding_forward.1']
    %7 = vsyncpa [#allocation3], 0
    loop: start=0, step=1, limit=4
    $region2: #{node_embedding_forward.1} parent=1 // loop_pre_header
      _
    $region3: #{node_embedding_forward.1} parent=1 // loop_header
      %s9 = sphi 0, %s13
      %p10 = scmp.ge.s32.totalorder %s9, 4
      %s19 = sphi 0, %s21
      %s22 = sphi 0, %s19
      %s23 = sphi 0, %s22
      %s39 = sphi 0, %s23
      %s43 = sphi 0, %s43
      %s45 = sphi 0, %s43
      %s46 = sphi 0, %s45
      %s60 = sphi 0, %s46
      %s66 = sphi 0, %s68
      %s69 = sphi 0, %s66
      %s70 = sphi 0, %s69
      %s86 = sphi 0, %s70
    $region4: #{node_embedding_forward.1} parent=1 // loop_header_branch
      %12 = sbr.rel (%p10) target = $region8
    $region5: #{node_embedding_forward.1} parent=1 // loop_body
      %s14 = ssub.s32 %s9, 1
      %s15 = ssub.s32 %s9, 2
      %s16 = sadd.s32 %s9, 1
      %s17 = ssub.s32 %s9, %s16
      %p18 = scmp.eq.s32.totalorder %s17, 0
      %s20 = sadd.s32 %s19, 1
      %s21 = scalar_select %p18, %s19, %s20
      %p24 = pneg %p18
      %p25 = scmp.eq.s32.totalorder %s9, 1
      %p26 = por %p24, %p25
      %p27 = scmp.ne.s32.totalorder %s19, %s22
      %p28 = scmp.eq.s32.totalorder %s9, 0
      %p29 = por %p27, %p28
      %p30 = scmp.ne.s32.totalorder %s19, %s22
      %p31 = scmp.eq.s32.totalorder %s14, 1
      %p32 = por %p30, %p31
      %p33 = scmp.ne.s32.totalorder %s22, %s23
      %p34 = scmp.eq.s32.totalorder %s14, 0
      %p35 = por %p33, %p34
      %p36 = scmp.ne.s32.totalorder %s22, %s23
      %p37 = scmp.eq.s32.totalorder %s15, 1
      %p38 = por %p36, %p37
      %p40 = scmp.ne.s32.totalorder %s23, %s39
      %p41 = scmp.eq.s32.totalorder %s15, 0
      %p42 = por %p40, %p41
      %s44 = sadd.s32 %s43, 1
      %p47 = scmp.eq.s32.totalorder %s9, 1
      %p48 = scmp.ne.s32.totalorder %s43, %s45
      %p49 = scmp.eq.s32.totalorder %s9, 0
      %p50 = por %p48, %p49
      %p51 = scmp.ne.s32.totalorder %s43, %s45
      %p52 = scmp.eq.s32.totalorder %s14, 1
      %p53 = por %p51, %p52
      %p54 = scmp.ne.s32.totalorder %s45, %s46
      %p55 = scmp.eq.s32.totalorder %s14, 0
      %p56 = por %p54, %p55
      %p57 = scmp.ne.s32.totalorder %s45, %s46
      %p58 = scmp.eq.s32.totalorder %s15, 1
      %p59 = por %p57, %p58
      %p61 = scmp.ne.s32.totalorder %s46, %s60
      %p62 = scmp.eq.s32.totalorder %s15, 0
      %p63 = por %p61, %p62
      %s64 = ssub.s32 %s9, %s16
      %p65 = scmp.eq.s32.totalorder %s64, 0
      %s67 = sadd.s32 %s66, 1
      %s68 = scalar_select %p65, %s66, %s67
      %p71 = pneg %p65
      %p72 = scmp.eq.s32.totalorder %s9, 1
      %p73 = por %p71, %p72
      %p74 = scmp.ne.s32.totalorder %s66, %s69
      %p75 = scmp.eq.s32.totalorder %s9, 0
      %p76 = por %p74, %p75
      %p77 = scmp.ne.s32.totalorder %s66, %s69
      %p78 = scmp.eq.s32.totalorder %s14, 1
      %p79 = por %p77, %p78
      %p80 = scmp.ne.s32.totalorder %s69, %s70
      %p81 = scmp.eq.s32.totalorder %s14, 0
      %p82 = por %p80, %p81
      %p83 = scmp.ne.s32.totalorder %s69, %s70
      %p84 = scmp.eq.s32.totalorder %s15, 1
      %p85 = por %p83, %p84
      %p87 = scmp.ne.s32.totalorder %s70, %s86
      %p88 = scmp.eq.s32.totalorder %s15, 0
      %p89 = por %p87, %p88
      %p90 = scmp.le.s32.totalorder 1, %s9
      %p91 = scmp.lt.s32.totalorder %s9, 3
      %p92 = pnand %p90, %p91
      %p93 = pneg %p92
      // Predicated region
      $region9: #{node_embedding_forward.1} parent=5 // pred_check
        _
      $region10: #{node_embedding_forward.1} parent=5 // pred_check_branch
        %95 = sbr.rel (%p92) target = $region12
      $region11: #{node_embedding_forward.1} parent=5 // pred_region
        %s96 = ssub.s32 %s9, 1
        // Predicated region
        $region13: #{node_embedding_forward.1} parent=11 // pred_check
          %p97 = pneg %p56
        $region14: #{node_embedding_forward.1} parent=11 // pred_check_branch
          %99 = sbr.rel (%p97) target = $region16
        $region15: #{node_embedding_forward.1} parent=11 // pred_region
          %s101 = ssub.s32 6144, 6144
          %102 = vsyncadd [#allocation3], %s101
          %s103 = sshll.u32 [#allocation2], 4
          %s104 = int_to_ptr.vmem [resolvable:$true] %s103
          %109 = dma.hbm_to_vmem [thread:$0]  %s1, 6144, %s104, [#allocation3], 128, 128, 8
        $region16: #{node_embedding_forward.1} parent=11 // pred_fallthru
          _
      $region12: #{node_embedding_forward.1} parent=5 // pred_fallthru
        _
      %p110 = scmp.lt.s32.totalorder %s9, 2
      // Predicated region
      $region17: #{node_embedding_forward.1} parent=5 // pred_check
        %p111 = pneg %p110
      $region18: #{node_embedding_forward.1} parent=5 // pred_check_branch
        %113 = sbr.rel (%p111) target = $region20
      $region19: #{node_embedding_forward.1} parent=5 // pred_region
        // Predicated region
        $region21: #{node_embedding_forward.1} parent=19 // pred_check
          %p114 = pneg %p29
        $region22: #{node_embedding_forward.1} parent=19 // pred_check_branch
          %116 = sbr.rel (%p114) target = $region24
        $region23: #{node_embedding_forward.1} parent=19 // pred_region
          %s117 = smul.u32 16, %s9
          %p118 = scmp.lt.s32.totalorder %s117, 31
          %s119 = scalar_select %p118, %s117, 31
          %s120 = smul.addr %s119, 8
          %s121 = scalar_lea.vmem %s0, %s120
          %s122 = smul.u32 16, %s9
        $region24: #{node_embedding_forward.1} parent=19 // pred_fallthru
          _
      $region20: #{node_embedding_forward.1} parent=5 // pred_fallthru
        _
      %p123 = scmp.le.s32.totalorder 1, %s9
      %p124 = scmp.lt.s32.totalorder %s9, 3
      %p125 = pnand %p123, %p124
      %p126 = pneg %p125
      // Predicated region
      $region25: #{node_embedding_forward.1} parent=5 // pred_check
        _
      $region26: #{node_embedding_forward.1} parent=5 // pred_check_branch
        %128 = sbr.rel (%p125) target = $region28
      $region27: #{node_embedding_forward.1} parent=5 // pred_region
        %s129 = ssub.s32 %s9, 1
        // Predicated region
        $region29: #{node_embedding_forward.1} parent=27 // pred_check
          %p130 = pneg %p56
        $region30: #{node_embedding_forward.1} parent=27 // pred_check_branch
          %132 = sbr.rel (%p130) target = $region32
        $region31: #{node_embedding_forward.1} parent=27 // pred_region
          %133 = dma.done [#allocation3], 6144
        $region32: #{node_embedding_forward.1} parent=27 // pred_fallthru
          _
        %s134 = smul.u32 16, %s14
        %p135 = scmp.lt.s32.totalorder %s134, 31
        %s136 = scalar_select %p135, %s134, 31
        %s137 = smul.addr %s136, 8
        %s138 = scalar_lea.vmem %s0, %s137
        %p139 = pneg %p35
        %p140 = pneg %p32
        %p141 = pneg %p56
        %p142 = pneg %p53
        %p143 = pneg %p82
        %p144 = pneg %p79
        %s145 = smul.u32 16, %s14
        %p146 = scmp.lt.s32.totalorder %s145, 31
        %s147 = scalar_select %p146, %s145, 31
        %s148 = smul.addr %s147, 8
        %s149 = scalar_lea.vmem %s2, %s148
        %s150 = smul.u32 16, %s14
        %p151 = scmp.lt.s32.totalorder %s150, 31
        %s152 = scalar_select %p151, %s150, 31
        %s153 = smul.addr %s152, 8
        %s154 = scalar_lea.vmem %s0, %s153
        %s155 = smul.u32 16, %s14
        %s156 = smul.u32 16, %s14
        %p157 = scmp.lt.s32.totalorder %s156, 31
        %s158 = scalar_select %p157, %s156, 31
        %s159 = smul.addr %s158, 8
        %s160 = scalar_lea.vmem %s2, %s159
        %s161 = smul.u32 16, %s14
        %v162 = vld [vmem:[%s154] sm:$0xff]
        %v163 = vld [vmem:[%s154 + $0x8] sm:$0xff]
        %v164 = vld [vmem:[%s154 + $0x10] sm:$0xff]
        %v165 = vld [vmem:[%s154 + $0x18] sm:$0xff]
        %v166 = vld [vmem:[%s154 + $0x20] sm:$0xff]
        %v167 = vld [vmem:[%s154 + $0x28] sm:$0xff]
        %v168 = vld [vmem:[%s154 + $0x30] sm:$0xff]
        %v169 = vld [vmem:[%s154 + $0x38] sm:$0xff]
        %v170 = vld [vmem:[%s154 + $0x40] sm:$0xff]
        %v171 = vld [vmem:[%s154 + $0x48] sm:$0xff]
        %v172 = vld [vmem:[%s154 + $0x50] sm:$0xff]
        %v173 = vld [vmem:[%s154 + $0x58] sm:$0xff]
        %v174 = vld [vmem:[%s154 + $0x60] sm:$0xff]
        %v175 = vld [vmem:[%s154 + $0x68] sm:$0xff]
        %v176 = vld [vmem:[%s154 + $0x70] sm:$0xff]
        %v177 = vld [vmem:[%s154 + $0x78] sm:$0xff]
        %v178 = vlaneseq
        %v179 = vand.u32 %v178, 127
        %v180 = vadd.s32 %v179, 128
        %v181 = vadd.s32 %v179, 256
        %182 = vset.pattern.permute.xlu0 0
        %183 = vperm.xlu0 %182, %v162
        %v184 = vpop.permute.xlu0 %183
        %185 = vset.pattern.permute.xlu0 0
        %186 = vperm.xlu0 %185, %v163
        %v187 = vpop.permute.xlu0 %186
        %188 = vset.pattern.permute.xlu0 0
        %189 = vperm.xlu0 %188, %v164
        %v190 = vpop.permute.xlu0 %189
        %191 = vset.pattern.permute.xlu0 0
        %192 = vperm.xlu0 %191, %v165
        %v193 = vpop.permute.xlu0 %192
        %194 = vset.pattern.permute.xlu0 0
        %195 = vperm.xlu0 %194, %v166
        %v196 = vpop.permute.xlu0 %195
        %197 = vset.pattern.permute.xlu0 0
        %198 = vperm.xlu0 %197, %v167
        %v199 = vpop.permute.xlu0 %198
        %200 = vset.pattern.permute.xlu0 0
        %201 = vperm.xlu0 %200, %v168
        %v202 = vpop.permute.xlu0 %201
        %203 = vset.pattern.permute.xlu0 0
        %204 = vperm.xlu0 %203, %v169
        %v205 = vpop.permute.xlu0 %204
        %206 = vset.pattern.permute.xlu0 0
        %207 = vperm.xlu0 %206, %v170
        %v208 = vpop.permute.xlu0 %207
        %209 = vset.pattern.permute.xlu0 0
        %210 = vperm.xlu0 %209, %v171
        %v211 = vpop.permute.xlu0 %210
        %212 = vset.pattern.permute.xlu0 0
        %213 = vperm.xlu0 %212, %v172
        %v214 = vpop.permute.xlu0 %213
        %215 = vset.pattern.permute.xlu0 0
        %216 = vperm.xlu0 %215, %v173
        %v217 = vpop.permute.xlu0 %216
        %218 = vset.pattern.permute.xlu0 0
        %219 = vperm.xlu0 %218, %v174
        %v220 = vpop.permute.xlu0 %219
        %221 = vset.pattern.permute.xlu0 0
        %222 = vperm.xlu0 %221, %v175
        %v223 = vpop.permute.xlu0 %222
        %224 = vset.pattern.permute.xlu0 0
        %225 = vperm.xlu0 %224, %v176
        %v226 = vpop.permute.xlu0 %225
        %227 = vset.pattern.permute.xlu0 0
        %228 = vperm.xlu0 %227, %v177
        %v229 = vpop.permute.xlu0 %228
        %vm230 = vcmp.eq.s32.totalorder %v184, %v179
        %vm231 = vcmp.eq.s32.totalorder %v184, %v180
        %vm232 = vcmp.eq.s32.totalorder %v184, %v181
        %vm233 = vcmp.eq.s32.totalorder %v187, %v179
        %vm234 = vcmp.eq.s32.totalorder %v187, %v180
        %vm235 = vcmp.eq.s32.totalorder %v187, %v181
        %vm236 = vcmp.eq.s32.totalorder %v190, %v179
        %vm237 = vcmp.eq.s32.totalorder %v190, %v180
        %vm238 = vcmp.eq.s32.totalorder %v190, %v181
        %vm239 = vcmp.eq.s32.totalorder %v193, %v179
        %vm240 = vcmp.eq.s32.totalorder %v193, %v180
        %vm241 = vcmp.eq.s32.totalorder %v193, %v181
        %vm242 = vcmp.eq.s32.totalorder %v196, %v179
        %vm243 = vcmp.eq.s32.totalorder %v196, %v180
        %vm244 = vcmp.eq.s32.totalorder %v196, %v181
        %vm245 = vcmp.eq.s32.totalorder %v199, %v179
        %vm246 = vcmp.eq.s32.totalorder %v199, %v180
        %vm247 = vcmp.eq.s32.totalorder %v199, %v181
        %vm248 = vcmp.eq.s32.totalorder %v202, %v179
        %vm249 = vcmp.eq.s32.totalorder %v202, %v180
        %vm250 = vcmp.eq.s32.totalorder %v202, %v181
        %vm251 = vcmp.eq.s32.totalorder %v205, %v179
        %vm252 = vcmp.eq.s32.totalorder %v205, %v180
        %vm253 = vcmp.eq.s32.totalorder %v205, %v181
        %vm254 = vcmp.eq.s32.totalorder %v208, %v179
        %vm255 = vcmp.eq.s32.totalorder %v208, %v180
        %vm256 = vcmp.eq.s32.totalorder %v208, %v181
        %vm257 = vcmp.eq.s32.totalorder %v211, %v179
        %vm258 = vcmp.eq.s32.totalorder %v211, %v180
        %vm259 = vcmp.eq.s32.totalorder %v211, %v181
        %vm260 = vcmp.eq.s32.totalorder %v214, %v179
        %vm261 = vcmp.eq.s32.totalorder %v214, %v180
        %vm262 = vcmp.eq.s32.totalorder %v214, %v181
        %vm263 = vcmp.eq.s32.totalorder %v217, %v179
        %vm264 = vcmp.eq.s32.totalorder %v217, %v180
        %vm265 = vcmp.eq.s32.totalorder %v217, %v181
        %vm266 = vcmp.eq.s32.totalorder %v220, %v179
        %vm267 = vcmp.eq.s32.totalorder %v220, %v180
        %vm268 = vcmp.eq.s32.totalorder %v220, %v181
        %vm269 = vcmp.eq.s32.totalorder %v223, %v179
        %vm270 = vcmp.eq.s32.totalorder %v223, %v180
        %vm271 = vcmp.eq.s32.totalorder %v223, %v181
        %vm272 = vcmp.eq.s32.totalorder %v226, %v179
        %vm273 = vcmp.eq.s32.totalorder %v226, %v180
        %vm274 = vcmp.eq.s32.totalorder %v226, %v181
        %vm275 = vcmp.eq.s32.totalorder %v229, %v179
        %vm276 = vcmp.eq.s32.totalorder %v229, %v180
        %vm277 = vcmp.eq.s32.totalorder %v229, %v181
        %v278 = vsel %vm230, 1, 0
        %v279 = vsel %vm231, 1, 0
        %v280 = vsel %vm232, 1, 0
        %v281 = vsel %vm233, 1, 0
        %v282 = vsel %vm234, 1, 0
        %v283 = vsel %vm235, 1, 0
        %v284 = vsel %vm236, 1, 0
        %v285 = vsel %vm237, 1, 0
        %v286 = vsel %vm238, 1, 0
        %v287 = vsel %vm239, 1, 0
        %v288 = vsel %vm240, 1, 0
        %v289 = vsel %vm241, 1, 0
        %v290 = vsel %vm242, 1, 0
        %v291 = vsel %vm243, 1, 0
        %v292 = vsel %vm244, 1, 0
        %v293 = vsel %vm245, 1, 0
        %v294 = vsel %vm246, 1, 0
        %v295 = vsel %vm247, 1, 0
        %v296 = vsel %vm248, 1, 0
        %v297 = vsel %vm249, 1, 0
        %v298 = vsel %vm250, 1, 0
        %v299 = vsel %vm251, 1, 0
        %v300 = vsel %vm252, 1, 0
        %v301 = vsel %vm253, 1, 0
        %v302 = vsel %vm254, 1, 0
        %v303 = vsel %vm255, 1, 0
        %v304 = vsel %vm256, 1, 0
        %v305 = vsel %vm257, 1, 0
        %v306 = vsel %vm258, 1, 0
        %v307 = vsel %vm259, 1, 0
        %v308 = vsel %vm260, 1, 0
        %v309 = vsel %vm261, 1, 0
        %v310 = vsel %vm262, 1, 0
        %v311 = vsel %vm263, 1, 0
        %v312 = vsel %vm264, 1, 0
        %v313 = vsel %vm265, 1, 0
        %v314 = vsel %vm266, 1, 0
        %v315 = vsel %vm267, 1, 0
        %v316 = vsel %vm268, 1, 0
        %v317 = vsel %vm269, 1, 0
        %v318 = vsel %vm270, 1, 0
        %v319 = vsel %vm271, 1, 0
        %v320 = vsel %vm272, 1, 0
        %v321 = vsel %vm273, 1, 0
        %v322 = vsel %vm274, 1, 0
        %v323 = vsel %vm275, 1, 0
        %v324 = vsel %vm276, 1, 0
        %v325 = vsel %vm277, 1, 0
        %v326 = vcvt.s32.f32 %v278
        %v327 = vcvt.s32.f32 %v279
        %v328 = vcvt.s32.f32 %v280
        %v329 = vcvt.s32.f32 %v281
        %v330 = vcvt.s32.f32 %v282
        %v331 = vcvt.s32.f32 %v283
        %v332 = vcvt.s32.f32 %v284
        %v333 = vcvt.s32.f32 %v285
        %v334 = vcvt.s32.f32 %v286
        %v335 = vcvt.s32.f32 %v287
        %v336 = vcvt.s32.f32 %v288
        %v337 = vcvt.s32.f32 %v289
        %v338 = vcvt.s32.f32 %v290
        %v339 = vcvt.s32.f32 %v291
        %v340 = vcvt.s32.f32 %v292
        %v341 = vcvt.s32.f32 %v293
        %v342 = vcvt.s32.f32 %v294
        %v343 = vcvt.s32.f32 %v295
        %v344 = vcvt.s32.f32 %v296
        %v345 = vcvt.s32.f32 %v297
        %v346 = vcvt.s32.f32 %v298
        %v347 = vcvt.s32.f32 %v299
        %v348 = vcvt.s32.f32 %v300
        %v349 = vcvt.s32.f32 %v301
        %v350 = vcvt.s32.f32 %v302
        %v351 = vcvt.s32.f32 %v303
        %v352 = vcvt.s32.f32 %v304
        %v353 = vcvt.s32.f32 %v305
        %v354 = vcvt.s32.f32 %v306
        %v355 = vcvt.s32.f32 %v307
        %v356 = vcvt.s32.f32 %v308
        %v357 = vcvt.s32.f32 %v309
        %v358 = vcvt.s32.f32 %v310
        %v359 = vcvt.s32.f32 %v311
        %v360 = vcvt.s32.f32 %v312
        %v361 = vcvt.s32.f32 %v313
        %v362 = vcvt.s32.f32 %v314
        %v363 = vcvt.s32.f32 %v315
        %v364 = vcvt.s32.f32 %v316
        %v365 = vcvt.s32.f32 %v317
        %v366 = vcvt.s32.f32 %v318
        %v367 = vcvt.s32.f32 %v319
        %v368 = vcvt.s32.f32 %v320
        %v369 = vcvt.s32.f32 %v321
        %v370 = vcvt.s32.f32 %v322
        %v371 = vcvt.s32.f32 %v323
        %v372 = vcvt.s32.f32 %v324
        %v373 = vcvt.s32.f32 %v325
        %v374 = vld [vmem:[#allocation2] sm:$0xff]
        %v375 = vld [vmem:[#allocation2 + $0x8] sm:$0xff]
        %v376 = vld [vmem:[#allocation2 + $0x10] sm:$0xff]
        %v377 = vld [vmem:[#allocation2 + $0x18] sm:$0xff]
        %v378 = vld [vmem:[#allocation2 + $0x20] sm:$0xff]
        %v379 = vld [vmem:[#allocation2 + $0x28] sm:$0xff]
        %v380 = vld [vmem:[#allocation2 + $0x30] sm:$0xff]
        %v381 = vld [vmem:[#allocation2 + $0x38] sm:$0xff]
        %v382 = vld [vmem:[#allocation2 + $0x40] sm:$0xff]
        %v383 = vld [vmem:[#allocation2 + $0x48] sm:$0xff]
        %v384 = vld [vmem:[#allocation2 + $0x50] sm:$0xff]
        %v385 = vld [vmem:[#allocation2 + $0x58] sm:$0xff]
        %v386 = vld [vmem:[#allocation2 + $0x60] sm:$0xff]
        %v387 = vld [vmem:[#allocation2 + $0x68] sm:$0xff]
        %v388 = vld [vmem:[#allocation2 + $0x70] sm:$0xff]
        %v389 = vld [vmem:[#allocation2 + $0x78] sm:$0xff]
        %v390 = vld [vmem:[#allocation2 + $0x80] sm:$0xff]
        %v391 = vld [vmem:[#allocation2 + $0x88] sm:$0xff]
        %v392 = vld [vmem:[#allocation2 + $0x90] sm:$0xff]
        %v393 = vld [vmem:[#allocation2 + $0x98] sm:$0xff]
        %v394 = vld [vmem:[#allocation2 + $0xa0] sm:$0xff]
        %v395 = vld [vmem:[#allocation2 + $0xa8] sm:$0xff]
        %v396 = vld [vmem:[#allocation2 + $0xb0] sm:$0xff]
        %v397 = vld [vmem:[#allocation2 + $0xb8] sm:$0xff]
        %v398 = vld [vmem:[#allocation2 + $0xc0] sm:$0xff]
        %v399 = vld [vmem:[#allocation2 + $0xc8] sm:$0xff]
        %v400 = vld [vmem:[#allocation2 + $0xd0] sm:$0xff]
        %v401 = vld [vmem:[#allocation2 + $0xd8] sm:$0xff]
        %v402 = vld [vmem:[#allocation2 + $0xe0] sm:$0xff]
        %v403 = vld [vmem:[#allocation2 + $0xe8] sm:$0xff]
        %v404 = vld [vmem:[#allocation2 + $0xf0] sm:$0xff]
        %v405 = vld [vmem:[#allocation2 + $0xf8] sm:$0xff]
        %v406 = vld [vmem:[#allocation2 + $0x100] sm:$0xff]
        %v407 = vld [vmem:[#allocation2 + $0x108] sm:$0xff]
        %v408 = vld [vmem:[#allocation2 + $0x110] sm:$0xff]
        %v409 = vld [vmem:[#allocation2 + $0x118] sm:$0xff]
        %v410 = vld [vmem:[#allocation2 + $0x120] sm:$0xff]
        %v411 = vld [vmem:[#allocation2 + $0x128] sm:$0xff]
        %v412 = vld [vmem:[#allocation2 + $0x130] sm:$0xff]
        %v413 = vld [vmem:[#allocation2 + $0x138] sm:$0xff]
        %v414 = vld [vmem:[#allocation2 + $0x140] sm:$0xff]
        %v415 = vld [vmem:[#allocation2 + $0x148] sm:$0xff]
        %v416 = vld [vmem:[#allocation2 + $0x150] sm:$0xff]
        %v417 = vld [vmem:[#allocation2 + $0x158] sm:$0xff]
        %v418 = vld [vmem:[#allocation2 + $0x160] sm:$0xff]
        %v419 = vld [vmem:[#allocation2 + $0x168] sm:$0xff]
        %v420 = vld [vmem:[#allocation2 + $0x170] sm:$0xff]
        %v421 = vld [vmem:[#allocation2 + $0x178] sm:$0xff]
        %422 = vmatprep.subr.mxu0 0.0
        %423 = vmatpush1.msra.mxu0 %v374
        %424 = vmatprep.subr.mxu0 0.0
        %425 = vmatpush1.msra.mxu0 %v375
        %426 = vmatprep.subr.mxu0 0.0
        %427 = vmatpush1.msra.mxu0 %v376
        %428 = vmatprep.subr.mxu0 0.0
        %429 = vmatpush1.msra.mxu0 %v377
        %430 = vmatprep.subr.mxu0 0.0
        %431 = vmatpush1.msra.mxu0 %v378
        %432 = vmatprep.subr.mxu0 0.0
        %433 = vmatpush1.msra.mxu0 %v379
        %434 = vmatprep.subr.mxu0 0.0
        %435 = vmatpush1.msra.mxu0 %v380
        %436 = vmatprep.subr.mxu0 0.0
        %437 = vmatpush1.msra.mxu0 %v381
        %438 = vmatprep.subr.mxu0 0.0
        %439 = vmatpush1.msra.mxu0 %v382
        %440 = vmatprep.subr.mxu0 0.0
        %441 = vmatpush1.msra.mxu0 %v383
        %442 = vmatprep.subr.mxu0 0.0
        %443 = vmatpush1.msra.mxu0 %v384
        %444 = vmatprep.subr.mxu0 0.0
        %445 = vmatpush1.msra.mxu0 %v385
        %446 = vmatprep.subr.mxu0 0.0
        %447 = vmatpush1.msra.mxu0 %v386
        %448 = vmatprep.subr.mxu0 0.0
        %449 = vmatpush1.msra.mxu0 %v387
        %450 = vmatprep.subr.mxu0 0.0
        %451 = vmatpush1.msra.mxu0 %v388
        %452 = vmatprep.subr.mxu0 0.0
        %453 = vmatpush1.msra.mxu0 %v389
        %454 = vmatprep.subr.mxu0 0.0
        %455 = vmatpush1.msra.mxu0 %v390
        %456 = vmatprep.subr.mxu0 0.0
        %457 = vmatpush1.msra.mxu0 %v391
        %458 = vmatprep.subr.mxu0 0.0
        %459 = vmatpush1.msra.mxu0 %v392
        %460 = vmatprep.subr.mxu0 0.0
        %461 = vmatpush1.msra.mxu0 %v393
        %462 = vmatprep.subr.mxu0 0.0
        %463 = vmatpush1.msra.mxu0 %v394
        %464 = vmatprep.subr.mxu0 0.0
        %465 = vmatpush1.msra.mxu0 %v395
        %466 = vmatprep.subr.mxu0 0.0
        %467 = vmatpush1.msra.mxu0 %v396
        %468 = vmatprep.subr.mxu0 0.0
        %469 = vmatpush1.msra.mxu0 %v397
        %470 = vmatprep.subr.mxu0 0.0
        %471 = vmatpush1.msra.mxu0 %v398
        %472 = vmatprep.subr.mxu0 0.0
        %473 = vmatpush1.msra.mxu0 %v399
        %474 = vmatprep.subr.mxu0 0.0
        %475 = vmatpush1.msra.mxu0 %v400
        %476 = vmatprep.subr.mxu0 0.0
        %477 = vmatpush1.msra.mxu0 %v401
        %478 = vmatprep.subr.mxu0 0.0
        %479 = vmatpush1.msra.mxu0 %v402
        %480 = vmatprep.subr.mxu0 0.0
        %481 = vmatpush1.msra.mxu0 %v403
        %482 = vmatprep.subr.mxu0 0.0
        %483 = vmatpush1.msra.mxu0 %v404
        %484 = vmatprep.subr.mxu0 0.0
        %485 = vmatpush1.msra.mxu0 %v405
        %486 = vmatprep.mubr.f32.mxu0 %v327
        %487 = vmatmul.mubr.f32.gmra.mrb[0].mxu0 %v326
        %v488 = vpop.f32.mrb[0].mxu0
        %v489 = vadd.f32 0.0, %v488
        %v490 = vpop.f32.mrb[0].mxu0
        %491 = vmatprep.mubr.f32.mxu0 %v330
        %492 = vmatmul.mubr.f32.gmra.mrb[0].mxu0 %v329
        %v493 = vpop.f32.mrb[0].mxu0
        %v494 = vadd.f32 0.0, %v493
        %v495 = vpop.f32.mrb[0].mxu0
        %496 = vmatprep.mubr.f32.mxu0 %v333
        %497 = vmatmul.mubr.f32.gmra.mrb[0].mxu0 %v332
        %v498 = vpop.f32.mrb[0].mxu0
        %v499 = vadd.f32 0.0, %v498
        %v500 = vpop.f32.mrb[0].mxu0
        %501 = vmatprep.mubr.f32.mxu0 %v336
        %502 = vmatmul.mubr.f32.gmra.mrb[0].mxu0 %v335
        %v503 = vpop.f32.mrb[0].mxu0
        %v504 = vadd.f32 0.0, %v503
        %v505 = vpop.f32.mrb[0].mxu0
        %506 = vmatprep.mubr.f32.mxu0 %v339
        %507 = vmatmul.mubr.f32.gmra.mrb[0].mxu0 %v338
        %v508 = vpop.f32.mrb[0].mxu0
        %v509 = vadd.f32 0.0, %v508
        %v510 = vpop.f32.mrb[0].mxu0
        %511 = vmatprep.mubr.f32.mxu0 %v342
        %512 = vmatmul.mubr.f32.gmra.mrb[0].mxu0 %v341
        %v513 = vpop.f32.mrb[0].mxu0
        %v514 = vadd.f32 0.0, %v513
        %v515 = vpop.f32.mrb[0].mxu0
        %516 = vmatprep.mubr.f32.mxu0 %v345
        %517 = vmatmul.mubr.f32.gmra.mrb[0].mxu0 %v344
        %v518 = vpop.f32.mrb[0].mxu0
        %v519 = vadd.f32 0.0, %v518
        %v520 = vpop.f32.mrb[0].mxu0
        %521 = vmatprep.mubr.f32.mxu0 %v348
        %522 = vmatmul.mubr.f32.gmra.mrb[0].mxu0 %v347
        %v523 = vpop.f32.mrb[0].mxu0
        %v524 = vadd.f32 0.0, %v523
        %v525 = vpop.f32.mrb[0].mxu0
        %526 = vmatprep.mubr.f32.mxu0 %v351
        %527 = vmatmul.mubr.f32.gmra.mrb[0].mxu0 %v350
        %v528 = vpop.f32.mrb[0].mxu0
        %v529 = vadd.f32 0.0, %v528
        %v530 = vpop.f32.mrb[0].mxu0
        %531 = vmatprep.mubr.f32.mxu0 %v354
        %532 = vmatmul.mubr.f32.gmra.mrb[0].mxu0 %v353
        %v533 = vpop.f32.mrb[0].mxu0
        %v534 = vadd.f32 0.0, %v533
        %v535 = vpop.f32.mrb[0].mxu0
        %536 = vmatprep.mubr.f32.mxu0 %v357
        %537 = vmatmul.mubr.f32.gmra.mrb[0].mxu0 %v356
        %v538 = vpop.f32.mrb[0].mxu0
        %v539 = vadd.f32 0.0, %v538
        %v540 = vpop.f32.mrb[0].mxu0
        %541 = vmatprep.mubr.f32.mxu0 %v360
        %542 = vmatmul.mubr.f32.gmra.mrb[0].mxu0 %v359
        %v543 = vpop.f32.mrb[0].mxu0
        %v544 = vadd.f32 0.0, %v543
        %v545 = vpop.f32.mrb[0].mxu0
        %546 = vmatprep.mubr.f32.mxu0 %v363
        %547 = vmatmul.mubr.f32.gmra.mrb[0].mxu0 %v362
        %v548 = vpop.f32.mrb[0].mxu0
        %v549 = vadd.f32 0.0, %v548
        %v550 = vpop.f32.mrb[0].mxu0
        %551 = vmatprep.mubr.f32.mxu0 %v366
        %552 = vmatmul.mubr.f32.gmra.mrb[0].mxu0 %v365
        %v553 = vpop.f32.mrb[0].mxu0
        %v554 = vadd.f32 0.0, %v553
        %v555 = vpop.f32.mrb[0].mxu0
        %556 = vmatprep.mubr.f32.mxu0 %v369
        %557 = vmatmul.mubr.f32.gmra.mrb[0].mxu0 %v368
        %v558 = vpop.f32.mrb[0].mxu0
        %v559 = vadd.f32 0.0, %v558
        %v560 = vpop.f32.mrb[0].mxu0
        %561 = vmatprep.mubr.f32.mxu0 %v372
        %562 = vmatmul.mubr.f32.gmra.mrb[0].mxu0 %v371
        %v563 = vpop.f32.mrb[0].mxu0
        %v564 = vadd.f32 0.0, %v563
        %v565 = vpop.f32.mrb[0].mxu0
        %566 = vdwg.mxu0
        %567 = vmatprep.subr.mxu0 0.0
        %568 = vmatpush1.msra.mxu0 %v406
        %569 = vmatprep.subr.mxu0 0.0
        %570 = vmatpush1.msra.mxu0 %v407
        %571 = vmatprep.subr.mxu0 0.0
        %572 = vmatpush1.msra.mxu0 %v408
        %573 = vmatprep.subr.mxu0 0.0
        %574 = vmatpush1.msra.mxu0 %v409
        %575 = vmatprep.subr.mxu0 0.0
        %576 = vmatpush1.msra.mxu0 %v410
        %577 = vmatprep.subr.mxu0 0.0
        %578 = vmatpush1.msra.mxu0 %v411
        %579 = vmatprep.subr.mxu0 0.0
        %580 = vmatpush1.msra.mxu0 %v412
        %581 = vmatprep.subr.mxu0 0.0
        %582 = vmatpush1.msra.mxu0 %v413
        %583 = vmatprep.subr.mxu0 0.0
        %584 = vmatpush1.msra.mxu0 %v414
        %585 = vmatprep.subr.mxu0 0.0
        %586 = vmatpush1.msra.mxu0 %v415
        %587 = vmatprep.subr.mxu0 0.0
        %588 = vmatpush1.msra.mxu0 %v416
        %589 = vmatprep.subr.mxu0 0.0
        %590 = vmatpush1.msra.mxu0 %v417
        %591 = vmatprep.subr.mxu0 0.0
        %592 = vmatpush1.msra.mxu0 %v418
        %593 = vmatprep.subr.mxu0 0.0
        %594 = vmatpush1.msra.mxu0 %v419
        %595 = vmatprep.subr.mxu0 0.0
        %596 = vmatpush1.msra.mxu0 %v420
        %597 = vmatprep.subr.mxu0 0.0
        %598 = vmatpush1.msra.mxu0 %v421
        %599 = vmatprep.subr.mxu0 0.0
        %600 = vmatpush1.msra.mxu0 0.0
        %601 = vmatprep.subr.mxu0 0.0
        %602 = vmatpush1.msra.mxu0 0.0
        %603 = vmatprep.subr.mxu0 0.0
        %604 = vmatpush1.msra.mxu0 0.0
        %605 = vmatprep.subr.mxu0 0.0
        %606 = vmatpush1.msra.mxu0 0.0
        %607 = vmatprep.subr.mxu0 0.0
        %608 = vmatpush1.msra.mxu0 0.0
        %609 = vmatprep.subr.mxu0 0.0
        %610 = vmatpush1.msra.mxu0 0.0
        %611 = vmatprep.subr.mxu0 0.0
        %612 = vmatpush1.msra.mxu0 0.0
        %613 = vmatprep.subr.mxu0 0.0
        %614 = vmatpush1.msra.mxu0 0.0
        %615 = vmatprep.subr.mxu0 0.0
        %616 = vmatpush1.msra.mxu0 0.0
        %617 = vmatprep.subr.mxu0 0.0
        %618 = vmatpush1.msra.mxu0 0.0
        %619 = vmatprep.subr.mxu0 0.0
        %620 = vmatpush1.msra.mxu0 0.0
        %621 = vmatprep.subr.mxu0 0.0
        %622 = vmatpush1.msra.mxu0 0.0
        %623 = vmatprep.subr.mxu0 0.0
        %624 = vmatpush1.msra.mxu0 0.0
        %625 = vmatprep.subr.mxu0 0.0
        %626 = vmatpush1.msra.mxu0 0.0
        %627 = vmatprep.subr.mxu0 0.0
        %628 = vmatpush1.msra.mxu0 0.0
        %629 = vmatprep.subr.mxu0 0.0
        %630 = vmatpush1.msra.mxu0 0.0
        %631 = vmatprep.mubr.f32.mxu0 0.0
        %632 = vmatmul.mubr.f32.gmra.mrb[0].mxu0 %v328
        %v633 = vpop.f32.mrb[0].mxu0
        %v634 = vadd.f32 %v489, %v633
        %v635 = vpop.f32.mrb[0].mxu0
        %636 = vmatprep.mubr.f32.mxu0 0.0
        %637 = vmatmul.mubr.f32.gmra.mrb[0].mxu0 %v331
        %v638 = vpop.f32.mrb[0].mxu0
        %v639 = vadd.f32 %v494, %v638
        %v640 = vpop.f32.mrb[0].mxu0
        %641 = vmatprep.mubr.f32.mxu0 0.0
        %642 = vmatmul.mubr.f32.gmra.mrb[0].mxu0 %v334
        %v643 = vpop.f32.mrb[0].mxu0
        %v644 = vadd.f32 %v499, %v643
        %v645 = vpop.f32.mrb[0].mxu0
        %646 = vmatprep.mubr.f32.mxu0 0.0
        %647 = vmatmul.mubr.f32.gmra.mrb[0].mxu0 %v337
        %v648 = vpop.f32.mrb[0].mxu0
        %v649 = vadd.f32 %v504, %v648
        %v650 = vpop.f32.mrb[0].mxu0
        %651 = vmatprep.mubr.f32.mxu0 0.0
        %652 = vmatmul.mubr.f32.gmra.mrb[0].mxu0 %v340
        %v653 = vpop.f32.mrb[0].mxu0
        %v654 = vadd.f32 %v509, %v653
        %v655 = vpop.f32.mrb[0].mxu0
        %656 = vmatprep.mubr.f32.mxu0 0.0
        %657 = vmatmul.mubr.f32.gmra.mrb[0].mxu0 %v343
        %v658 = vpop.f32.mrb[0].mxu0
        %v659 = vadd.f32 %v514, %v658
        %v660 = vpop.f32.mrb[0].mxu0
        %661 = vmatprep.mubr.f32.mxu0 0.0
        %662 = vmatmul.mubr.f32.gmra.mrb[0].mxu0 %v346
        %v663 = vpop.f32.mrb[0].mxu0
        %v664 = vadd.f32 %v519, %v663
        %v665 = vpop.f32.mrb[0].mxu0
        %666 = vmatprep.mubr.f32.mxu0 0.0
        %667 = vmatmul.mubr.f32.gmra.mrb[0].mxu0 %v349
        %v668 = vpop.f32.mrb[0].mxu0
        %v669 = vadd.f32 %v524, %v668
        %v670 = vpop.f32.mrb[0].mxu0
        %671 = vmatprep.mubr.f32.mxu0 0.0
        %672 = vmatmul.mubr.f32.gmra.mrb[0].mxu0 %v352
        %v673 = vpop.f32.mrb[0].mxu0
        %v674 = vadd.f32 %v529, %v673
        %v675 = vpop.f32.mrb[0].mxu0
        %676 = vmatprep.mubr.f32.mxu0 0.0
        %677 = vmatmul.mubr.f32.gmra.mrb[0].mxu0 %v355
        %v678 = vpop.f32.mrb[0].mxu0
        %v679 = vadd.f32 %v534, %v678
        %v680 = vpop.f32.mrb[0].mxu0
        %681 = vmatprep.mubr.f32.mxu0 0.0
        %682 = vmatmul.mubr.f32.gmra.mrb[0].mxu0 %v358
        %v683 = vpop.f32.mrb[0].mxu0
        %v684 = vadd.f32 %v539, %v683
        %v685 = vpop.f32.mrb[0].mxu0
        %686 = vmatprep.mubr.f32.mxu0 0.0
        %687 = vmatmul.mubr.f32.gmra.mrb[0].mxu0 %v361
        %v688 = vpop.f32.mrb[0].mxu0
        %v689 = vadd.f32 %v544, %v688
        %v690 = vpop.f32.mrb[0].mxu0
        %691 = vmatprep.mubr.f32.mxu0 0.0
        %692 = vmatmul.mubr.f32.gmra.mrb[0].mxu0 %v364
        %v693 = vpop.f32.mrb[0].mxu0
        %v694 = vadd.f32 %v549, %v693
        %v695 = vpop.f32.mrb[0].mxu0
        %696 = vmatprep.mubr.f32.mxu0 0.0
        %697 = vmatmul.mubr.f32.gmra.mrb[0].mxu0 %v367
        %v698 = vpop.f32.mrb[0].mxu0
        %v699 = vadd.f32 %v554, %v698
        %v700 = vpop.f32.mrb[0].mxu0
        %701 = vmatprep.mubr.f32.mxu0 0.0
        %702 = vmatmul.mubr.f32.gmra.mrb[0].mxu0 %v370
        %v703 = vpop.f32.mrb[0].mxu0
        %v704 = vadd.f32 %v559, %v703
        %v705 = vpop.f32.mrb[0].mxu0
        %706 = vmatprep.mubr.f32.mxu0 0.0
        %707 = vmatmul.mubr.f32.gmra.mrb[0].mxu0 %v373
        %v708 = vpop.f32.mrb[0].mxu0
        %v709 = vadd.f32 %v564, %v708
        %v710 = vpop.f32.mrb[0].mxu0
        %711 = vdwg.mxu0
        %712 = vst [vmem:[%s160] sm:$0xff] %v634
        %713 = vst [vmem:[%s160 + $0x8] sm:$0xff] %v639
        %714 = vst [vmem:[%s160 + $0x10] sm:$0xff] %v644
        %715 = vst [vmem:[%s160 + $0x18] sm:$0xff] %v649
        %716 = vst [vmem:[%s160 + $0x20] sm:$0xff] %v654
        %717 = vst [vmem:[%s160 + $0x28] sm:$0xff] %v659
        %718 = vst [vmem:[%s160 + $0x30] sm:$0xff] %v664
        %719 = vst [vmem:[%s160 + $0x38] sm:$0xff] %v669
        %720 = vst [vmem:[%s160 + $0x40] sm:$0xff] %v674
        %721 = vst [vmem:[%s160 + $0x48] sm:$0xff] %v679
        %722 = vst [vmem:[%s160 + $0x50] sm:$0xff] %v684
        %723 = vst [vmem:[%s160 + $0x58] sm:$0xff] %v689
        %724 = vst [vmem:[%s160 + $0x60] sm:$0xff] %v694
        %725 = vst [vmem:[%s160 + $0x68] sm:$0xff] %v699
        %726 = vst [vmem:[%s160 + $0x70] sm:$0xff] %v704
        %727 = vst [vmem:[%s160 + $0x78] sm:$0xff] %v709
        %s728 = smul.u32 16, %s14
        %p729 = scmp.lt.s32.totalorder %s728, 31
        %s730 = scalar_select %p729, %s728, 31
        %s731 = smul.addr %s730, 8
        %s732 = scalar_lea.vmem %s2, %s731
        // Predicated region
        $region33: #{node_embedding_forward.1} parent=27 // pred_check
          %p733 = pneg %p79
        $region34: #{node_embedding_forward.1} parent=27 // pred_check_branch
          %735 = sbr.rel (%p733) target = $region36
        $region35: #{node_embedding_forward.1} parent=27 // pred_region
          %s736 = smul.u32 16, %s14
        $region36: #{node_embedding_forward.1} parent=27 // pred_fallthru
          _
      $region28: #{node_embedding_forward.1} parent=5 // pred_fallthru
        _
      %p737 = scmp.le.s32.totalorder 2, %s9
      // Predicated region
      $region37: #{node_embedding_forward.1} parent=5 // pred_check
        %p738 = pneg %p737
      $region38: #{node_embedding_forward.1} parent=5 // pred_check_branch
        %740 = sbr.rel (%p738) target = $region40
      $region39: #{node_embedding_forward.1} parent=5 // pred_region
        %s741 = ssub.s32 %s9, 2
        // Predicated region
        $region41: #{node_embedding_forward.1} parent=39 // pred_check
          %p742 = pneg %p85
        $region42: #{node_embedding_forward.1} parent=39 // pred_check_branch
          %744 = sbr.rel (%p742) target = $region44
        $region43: #{node_embedding_forward.1} parent=39 // pred_region
          %s745 = smul.u32 16, %s15
          %p746 = scmp.lt.s32.totalorder %s745, 31
          %s747 = scalar_select %p746, %s745, 31
          %s748 = smul.addr %s747, 8
          %s749 = scalar_lea.vmem %s2, %s748
        $region44: #{node_embedding_forward.1} parent=39 // pred_fallthru
          _
      $region40: #{node_embedding_forward.1} parent=5 // pred_fallthru
        _
    $region6: #{node_embedding_forward.1} parent=1 // loop_footer
      %s13 = sadd.s32 1, %s9
    $region7: #{node_embedding_forward.1} parent=1 // loop_footer_branch
      %8 = sbr.rel target = $region3
    $region8: #{node_embedding_forward.1} parent=1 // loop_exit
      _
    %750 = vsyncpa [#allocation3], 1
    %s751 = scalar_lea.sflag [#allocation3], 1
    %752 = vsyncpa %s751, 1

</llo_original>
